<compile_context>
chip_gen: v7x
topology: tpu7x:2x2x1
jax: 0.10.0
libtpu: 0.0.40
codegen_flags: <defaults>
</compile_context>

<pallas_src>
import jax
import jax.numpy as jnp
from jax.experimental import pallas as pl
from jax.experimental.pallas import tpu as pltpu

_MiB = 1024 * 1024


def _round_up(x, m):
    return ((x + m - 1) // m) * m


def _cdiv(a, b):
    return -(-a // b)


# --------------------------------------------------------------------------
# Kernel
# --------------------------------------------------------------------------
def _ffn_kernel(x_ref, w1t_ref, w3t_ref, w2t_ref, o_ref, acc_ref):
    # x_ref:   (tm, dim)   token tile (same block across the hidden axis)
    # w1t_ref: (dim, th)   w1.T columns for hidden tile k
    # w3t_ref: (dim, th)   w3.T columns for hidden tile k
    # w2t_ref: (th, dim)   w2.T rows for hidden tile k
    # o_ref:   (tm, dim)   output tile (resident across the hidden axis)
    # acc_ref: (tm, dim)   f32 accumulator scratch
    k = pl.program_id(1)

    x = x_ref[...]
    h1 = jnp.dot(x, w1t_ref[...], preferred_element_type=jnp.float32)
    h3 = jnp.dot(x, w3t_ref[...], preferred_element_type=jnp.float32)
    gated = (h1 * jax.nn.sigmoid(h1)) * h3                      # f32 SwiGLU gate
    partial = jnp.dot(gated.astype(x.dtype), w2t_ref[...],
                      preferred_element_type=jnp.float32)

    @pl.when(k == 0)
    def _():
        acc_ref[...] = partial            # assign, not zero-fill + add

    @pl.when(k > 0)
    def _():
        acc_ref[...] += partial

    @pl.when(k == pl.num_programs(1) - 1)
    def _():
        o_ref[...] = acc_ref[...].astype(o_ref.dtype)


# --------------------------------------------------------------------------
# Device / tile selection helpers
# --------------------------------------------------------------------------
def _device_info():
    kind = ""
    try:
        kind = jax.devices()[0].device_kind.lower()
    except Exception:
        pass
    vmem_cap = 64 * _MiB if "v7" in kind else 128 * _MiB
    try:
        vmem_cap = int(pltpu.get_tpu_info().vmem_capacity_bytes)
    except Exception:
        pass
    return kind, vmem_cap


def _default_tiles(kind):
    # (tm_target, th_target).  AI ~ tm FLOP per streamed weight byte.
    if "v7" in kind:
        return 768, 256      # 2 TCs, 64 MiB VMEM: shrink th before tm
    if "v6" in kind:
        return 1024, 512     # needs tm >= ~650 to be MXU-bound
    if "v5" in kind:
        return 256, 512      # tm=256 already reaches the v5e compute roofline
    return 512, 256


def _choose_th(hidden, th_target):
    if hidden <= th_target:
        return hidden
    for cand in range(th_target, 127, -128):     # lane-aligned divisors of hidden
        if hidden % cand == 0:
            return cand
    return hidden                                # fall back: whole hidden resident


def _choose_tm(tokens, tm_target, is_v7):
    if tokens <= tm_target:
        if is_v7 and tokens >= 16:
            # >=2 blocks on the "parallel" token axis so both TensorCores work.
            return _round_up(_cdiv(tokens, 2), 8)
        return _round_up(tokens, 8)
    # Prefer an MXU-aligned tile that divides tokens exactly (no pad pass), but
    # don't shrink below tm_target/2 (weight re-streaming would dominate).
    for cand in range(tm_target, tm_target // 2 - 1, -128):
        if cand >= 128 and tokens % cand == 0:
            return cand
    return tm_target


def _vmem_estimate(tm, th, dim, in_item, out_item):
    est = 2 * tm * dim * in_item          # x tile, double-buffered
    est += 2 * 2 * dim * th * in_item     # w1t + w3t tiles, double-buffered
    est += 2 * th * dim * in_item         # w2t tile, double-buffered
    est += 2 * tm * dim * out_item        # output tile, double-buffered
    est += tm * dim * 4                   # f32 accumulator scratch
    est += 3 * tm * th * 4                # f32 h1 / h3 / gated intermediates
    return est


# --------------------------------------------------------------------------
# One-time weight preparation (do this at parameter-load time)
# --------------------------------------------------------------------------
def prepare_ffn_weights(w1, w2, w3, *, compute_dtype=jnp.bfloat16):
    """Pre-transpose and cast the FFN weights (call once at load time).

    w1, w3: (hidden, dim); w2: (dim, hidden).
    Returns (w1t, w3t, w2t) with shapes (dim, hidden), (dim, hidden), (hidden, dim).
    """
    w1t = jnp.asarray(w1, compute_dtype).T
    w3t = jnp.asarray(w3, compute_dtype).T
    w2t = jnp.asarray(w2, compute_dtype).T
    return w1t, w3t, w2t


# --------------------------------------------------------------------------
# Pallas wrapper (takes prepared weights)
# --------------------------------------------------------------------------
def feed_forward_pallas(x, w1t, w3t, w2t, *, tm=None, th=None,
                        compute_dtype=jnp.bfloat16, weight_buffers=2):
    """x: (..., dim); w1t/w3t: (dim, hidden); w2t: (hidden, dim)."""
    orig_shape = x.shape
    dim = orig_shape[-1]
    hidden = w2t.shape[0]
    assert w1t.shape == (dim, hidden) and w3t.shape == (dim, hidden)
    assert w2t.shape == (hidden, dim)
    out_dtype = x.dtype

    kind, vmem_cap = _device_info()
    is_v7 = "v7" in kind
    tm_target, th_target = _default_tiles(kind)
    if tm is not None:
        tm_target = tm
    if th is None:
        th = _choose_th(hidden, th_target)
    assert hidden % th == 0 and (th % 128 == 0 or th == hidden)

    tokens = 1
    for s in orig_shape[:-1]:
        tokens *= s
    x2d = x.reshape(tokens, dim)
    if x2d.dtype != compute_dtype:
        x2d = x2d.astype(compute_dtype)      # skipped when activations already bf16

    in_item = jnp.dtype(compute_dtype).itemsize
    out_item = jnp.dtype(out_dtype).itemsize

    tm_eff = _choose_tm(tokens, tm_target, is_v7)

    # Fit the working set under the *physical* VMEM budget (v7x: 64 MiB).
    budget = max(16 * _MiB, vmem_cap - 8 * _MiB)
    while _vmem_estimate(tm_eff, th, dim, in_item, out_item) > budget and tm_eff > 128:
        tm_eff = max(128, _round_up(tm_eff // 2, 8))
    while (_vmem_estimate(tm_eff, th, dim, in_item, out_item) > budget
           and th > 128 and th % 256 == 0):
        th //= 2

    tokens_pad = _round_up(tokens, tm_eff)
    if tokens_pad != tokens:
        x2d = jnp.pad(x2d, ((0, tokens_pad - tokens), (0, 0)))

    n_h = hidden // th
    n_tok = tokens_pad // tm_eff

    est = _vmem_estimate(tm_eff, th, dim, in_item, out_item)
    vmem_limit = int(min(budget, max(32 * _MiB, int(1.25 * est))))

    # Optional deeper weight buffering for the decode regime (off by default).
    w_kwargs = {}
    if weight_buffers > 2:
        w_kwargs = dict(pipeline_mode=pl.Buffered(weight_buffers))

    cost = pl.CostEstimate(
        flops=6 * tokens_pad * dim * hidden,
        transcendentals=tokens_pad * hidden,
        bytes_accessed=(3 * dim * hidden * in_item * n_tok
                        + tokens_pad * dim * (in_item + out_item)),
    )

    out2d = pl.pallas_call(
        _ffn_kernel,
        out_shape=jax.ShapeDtypeStruct((tokens_pad, dim), out_dtype),
        grid_spec=pltpu.PrefetchScalarGridSpec(
            num_scalar_prefetch=0,
            grid=(n_tok, n_h),                          # (tokens, hidden-reduction)
            in_specs=[
                pl.BlockSpec((tm_eff, dim), lambda i, k: (i, 0)),            # x tile
                pl.BlockSpec((dim, th), lambda i, k: (0, k), **w_kwargs),    # w1.T tile
                pl.BlockSpec((dim, th), lambda i, k: (0, k), **w_kwargs),    # w3.T tile
                pl.BlockSpec((th, dim), lambda i, k: (k, 0), **w_kwargs),    # w2.T tile
            ],
            out_specs=pl.BlockSpec((tm_eff, dim), lambda i, k: (i, 0)),
            scratch_shapes=[pltpu.VMEM((tm_eff, dim), jnp.float32)],
        ),
        compiler_params=pltpu.CompilerParams(
            dimension_semantics=("parallel", "arbitrary"),
            vmem_limit_bytes=vmem_limit),
        cost_estimate=cost,
    )(x2d, w1t, w3t, w2t)

    if tokens_pad != tokens:
        out2d = out2d[:tokens]
    return out2d.reshape(orig_shape)


def feed_forward(x, w1, w2, w3, *, tm=None, th=None, compute_dtype=jnp.bfloat16):
    """Convenience wrapper matching the nn.Module signature.

    NOTE: in production call prepare_ffn_weights() once at load time and reuse
    the prepared operands; doing it here per call re-reads the weights in HBM.
    """
    w1t, w3t, w2t = prepare_ffn_weights(w1, w2, w3, compute_dtype=compute_dtype)
    return feed_forward_pallas(x, w1t, w3t, w2t, tm=tm, th=th,
                               compute_dtype=compute_dtype)


# --------------------------------------------------------------------------
# Reference (mirrors the PyTorch forward) and demo
# --------------------------------------------------------------------------
def feed_forward_ref(x, w1, w2, w3):
    h1 = x @ w1.T
    h3 = x @ w3.T
    return (jax.nn.silu(h1) * h3) @ w2.T


if __name__ == "__main__":
    # Module-init arithmetic (mirrors FeedForward.__init__):
    dim = 128
    ffn_dim_multiplier = 1.3
    multiple_of = 128
    hidden_dim = int(dim * ffn_dim_multiplier)
    hidden_dim = multiple_of * ((hidden_dim + multiple_of - 1) // multiple_of)  # -> 256

    batch, seq = 2, 8

    key = jax.random.PRNGKey(0)
    kx, k1, k2, k3 = jax.random.split(key, 4)
    x = jax.random.normal(kx, (batch, seq, dim), dtype=jnp.float32)
    # TODO(synk): the real module loads w1/w2/w3 from consolidated.00.pth;
    # deterministic synthetic weights with the checkpoint's shapes are used here.
    w1 = jax.random.normal(k1, (hidden_dim, dim), dtype=jnp.float32) * 0.02
    w2 = jax.random.normal(k2, (dim, hidden_dim), dtype=jnp.float32) * 0.02
    w3 = jax.random.normal(k3, (hidden_dim, dim), dtype=jnp.float32) * 0.02

    # One-time weight prep (transpose + bf16 cast), then run the fused kernel.
    w1t, w3t, w2t = prepare_ffn_weights(w1, w2, w3)
    out = feed_forward_pallas(x, w1t, w3t, w2t)
    jax.block_until_ready(out)

    ref = feed_forward_ref(x, w1, w2, w3)
    # bf16 compute with f32 accumulation vs f32 reference -> relaxed tolerance.
    assert jnp.allclose(out, ref, atol=2e-3, rtol=2e-2), "mismatch vs reference"

    print("KERNEL_OK")
</pallas_src>

<mosaic_0001>
module attributes {stable_mosaic.version = 11 : i64} {
  func.func @_ffn_kernel(%arg0: i32, %arg1: i32, %arg2: memref<16x128xbf16, #tpu.memory_space<vmem>>, %arg3: memref<128x256xbf16, #tpu.memory_space<vmem>>, %arg4: memref<128x256xbf16, #tpu.memory_space<vmem>>, %arg5: memref<256x128xbf16, #tpu.memory_space<vmem>>, %arg6: memref<16x128xf32, #tpu.memory_space<vmem>>, %arg7: memref<16x128xf32, #tpu.memory_space<vmem>>) attributes {dimension_semantics = [#tpu.dimension_semantics<parallel>, #tpu.dimension_semantics<arbitrary>], iteration_bounds = array<i64: 1, 1>, scalar_prefetch = 0 : i64, scratch_operands = 1 : i64, tpu.core_type = #tpu.core_type<tc>, window_params = [{transform_indices = @transform_0, window_bounds = array<i64: 16, 128>}, {transform_indices = @transform_1, window_bounds = array<i64: 128, 256>}, {transform_indices = @transform_2, window_bounds = array<i64: 128, 256>}, {transform_indices = @transform_3, window_bounds = array<i64: 256, 128>}, {transform_indices = @transform_4, window_bounds = array<i64: 16, 128>}]} {
    %c0 = arith.constant 0 : index
    %c0_0 = arith.constant 0 : index
    %0 = vector.load %arg2[%c0, %c0_0] : memref<16x128xbf16, #tpu.memory_space<vmem>>, vector<16x128xbf16>
    %c0_1 = arith.constant 0 : index
    %c0_2 = arith.constant 0 : index
    %1 = vector.load %arg3[%c0_1, %c0_2] : memref<128x256xbf16, #tpu.memory_space<vmem>>, vector<128x256xbf16>
    %cst = arith.constant dense<0.000000e+00> : vector<16x256xf32>
    %2 = tpu.matmul %0, %1, %cst {dimension_numbers = #tpu.dot_dimension_numbers<[1], [0], [0], [1], [0, 0, 1, 1], [], []>} : vector<16x128xbf16>, vector<128x256xbf16>, vector<16x256xf32> -> vector<16x256xf32>
    %c0_3 = arith.constant 0 : index
    %c0_4 = arith.constant 0 : index
    %3 = vector.load %arg4[%c0_3, %c0_4] : memref<128x256xbf16, #tpu.memory_space<vmem>>, vector<128x256xbf16>
    %cst_5 = arith.constant dense<0.000000e+00> : vector<16x256xf32>
    %4 = tpu.matmul %0, %3, %cst_5 {dimension_numbers = #tpu.dot_dimension_numbers<[1], [0], [0], [1], [0, 0, 1, 1], [], []>} : vector<16x128xbf16>, vector<128x256xbf16>, vector<16x256xf32> -> vector<16x256xf32>
    %5 = arith.negf %2 : vector<16x256xf32>
    %6 = math.exp %5 : vector<16x256xf32>
    %cst_6 = arith.constant 1.000000e+00 : f32
    %7 = vector.broadcast %cst_6 : f32 to vector<16x256xf32>
    %8 = arith.addf %7, %6 : vector<16x256xf32>
    %9 = arith.divf %7, %8 : vector<16x256xf32>
    %10 = arith.mulf %2, %9 : vector<16x256xf32>
    %11 = arith.mulf %10, %4 : vector<16x256xf32>
    %12 = arith.truncf %11 : vector<16x256xf32> to vector<16x256xbf16>
    %c0_7 = arith.constant 0 : index
    %c0_8 = arith.constant 0 : index
    %13 = vector.load %arg5[%c0_7, %c0_8] : memref<256x128xbf16, #tpu.memory_space<vmem>>, vector<256x128xbf16>
    %cst_9 = arith.constant dense<0.000000e+00> : vector<16x128xf32>
    %14 = tpu.matmul %12, %13, %cst_9 {dimension_numbers = #tpu.dot_dimension_numbers<[1], [0], [0], [1], [0, 0, 1, 1], [], []>} : vector<16x256xbf16>, vector<256x128xbf16>, vector<16x128xf32> -> vector<16x128xf32>
    %c0_i32 = arith.constant 0 : i32
    %15 = arith.cmpi eq, %arg1, %c0_i32 : i32
    %16 = arith.extui %15 : i1 to i32
    %c0_i32_10 = arith.constant 0 : i32
    %17 = arith.cmpi ne, %16, %c0_i32_10 : i32
    scf.if %17 {
      %c0_15 = arith.constant 0 : index
      %c0_16 = arith.constant 0 : index
      %24 = vector.load %arg7[%c0_15, %c0_16] : memref<16x128xf32, #tpu.memory_space<vmem>>, vector<16x128xf32>
      tpu.vector_store %arg7[%c0_15, %c0_16], %14 {strides = array<i32>} : memref<16x128xf32, #tpu.memory_space<vmem>>, vector<16x128xf32>,
    } else {
    }
    %c0_i32_11 = arith.constant 0 : i32
    %18 = arith.cmpi sgt, %arg1, %c0_i32_11 : i32
    %19 = arith.extui %18 : i1 to i32
    %c0_i32_12 = arith.constant 0 : i32
    %20 = arith.cmpi ne, %19, %c0_i32_12 : i32
    scf.if %20 {
      %c0_15 = arith.constant 0 : index
      %c0_16 = arith.constant 0 : index
      %24 = vector.load %arg7[%c0_15, %c0_16] : memref<16x128xf32, #tpu.memory_space<vmem>>, vector<16x128xf32>
      %25 = arith.addf %24, %14 : vector<16x128xf32>
      %c0_17 = arith.constant 0 : index
      %c0_18 = arith.constant 0 : index
      %26 = vector.load %arg7[%c0_17, %c0_18] : memref<16x128xf32, #tpu.memory_space<vmem>>, vector<16x128xf32>
      tpu.vector_store %arg7[%c0_17, %c0_18], %25 {strides = array<i32>} : memref<16x128xf32, #tpu.memory_space<vmem>>, vector<16x128xf32>,
    } else {
    }
    %c0_i32_13 = arith.constant 0 : i32
    %21 = arith.cmpi eq, %arg1, %c0_i32_13 : i32
    %22 = arith.extui %21 : i1 to i32
    %c0_i32_14 = arith.constant 0 : i32
    %23 = arith.cmpi ne, %22, %c0_i32_14 : i32
    scf.if %23 {
      %c0_15 = arith.constant 0 : index
      %c0_16 = arith.constant 0 : index
      %24 = vector.load %arg7[%c0_15, %c0_16] : memref<16x128xf32, #tpu.memory_space<vmem>>, vector<16x128xf32>
      %c0_17 = arith.constant 0 : index
      %c0_18 = arith.constant 0 : index
      %25 = vector.load %arg6[%c0_17, %c0_18] : memref<16x128xf32, #tpu.memory_space<vmem>>, vector<16x128xf32>
      tpu.vector_store %arg6[%c0_17, %c0_18], %24 {strides = array<i32>} : memref<16x128xf32, #tpu.memory_space<vmem>>, vector<16x128xf32>,
    } else {
    }
    return
  }
  func.func @transform_0(%arg0: i32, %arg1: i32) -> (i32, i32) {
    %c0_i32 = arith.constant 0 : i32
    %c0_i32_0 = arith.constant 0 : i32
    return %arg0, %c0_i32 : i32, i32
  }
  func.func @transform_1(%arg0: i32, %arg1: i32) -> (i32, i32) {
    %c0_i32 = arith.constant 0 : i32
    %c0_i32_0 = arith.constant 0 : i32
    return %c0_i32, %arg1 : i32, i32
  }
  func.func @transform_2(%arg0: i32, %arg1: i32) -> (i32, i32) {
    %c0_i32 = arith.constant 0 : i32
    %c0_i32_0 = arith.constant 0 : i32
    return %c0_i32, %arg1 : i32, i32
  }
  func.func @transform_3(%arg0: i32, %arg1: i32) -> (i32, i32) {
    %c0_i32 = arith.constant 0 : i32
    %c0_i32_0 = arith.constant 0 : i32
    return %arg1, %c0_i32 : i32, i32
  }
  func.func @transform_4(%arg0: i32, %arg1: i32) -> (i32, i32) {
    %c0_i32 = arith.constant 0 : i32
    %c0_i32_0 = arith.constant 0 : i32
    return %arg0, %c0_i32 : i32, i32
  }
}

</mosaic_0001>

<llo_original>
// kernel: tpu_custom_call.1
$region0: #{tpu_custom_call.1}
  #allocation0 [shape = 'u32[]', space=smem, size = 0x4, offset = 0x4, fixed_abs, tag = 'smem constant byte address 0x4 - core index']
  #allocation1 [shape = 'u32[144,128]{1,0:T(1,128)}', space=vmem, size = 0x12000, scoped, tag = 'internal scratch']
  #allocation2 [shape = 'f32[16,128]{1,0:T(8,128)}', space=vmem, size = 0x2000, scoped, tag = 'scratch operand']
  %s0 = inlined_call_operand.hbm [shape: bf16[16,128], index: 0, kind: input, shape index: {}]
  %s1 = inlined_call_operand.hbm [shape: bf16[128,256], index: 1, kind: input, shape index: {}]
  %s2 = inlined_call_operand.hbm [shape: bf16[128,256], index: 2, kind: input, shape index: {}]
  %s3 = inlined_call_operand.hbm [shape: bf16[256,128], index: 3, kind: input, shape index: {}]
  %s4 = inlined_call_operand.hbm [shape: f32[16,128], index: 4, kind: output, shape index: {}]
  %s5 = sld [smem:[#allocation0]]
  $region54: #{tpu_custom_call.1} parent=0
    _
  %s7 = ssub.s32 1, %s5
  %s8 = scalar_select 0, %s7, %s5
  $region1: #{tpu_custom_call.1} parent=0
    #allocation3 [shape = 'u8[4096]{0}', space=vmem, size = 0x1000, scoped, tag = 'input window, operand 0, single buffered']
    #allocation4 [shape = 's32[1]{0}', space=sflag, size = 0x4, scoped, tag = 'scoped memory for tpu_custom_call.1']
    #allocation5 [shape = 's32[1]{0}', space=sflag, size = 0x4, scoped, tag = 'scoped memory for tpu_custom_call.1']
    #allocation6 [shape = 'u8[65536]{0}', space=vmem, size = 0x10000, scoped, tag = 'input window, operand 1, single buffered']
    #allocation7 [shape = 's32[1]{0}', space=sflag, size = 0x4, scoped, tag = 'scoped memory for tpu_custom_call.1']
    #allocation8 [shape = 'u8[65536]{0}', space=vmem, size = 0x10000, scoped, tag = 'input window, operand 2, single buffered']
    #allocation9 [shape = 'u8[65536]{0}', space=vmem, size = 0x10000, scoped, tag = 'input window, operand 3, single buffered']
    #allocation10 [shape = 's32[1]{0}', space=sflag, size = 0x4, scoped, tag = 'scoped memory for tpu_custom_call.1']
    #allocation11 [shape = 'u8[8192]{0}', space=vmem, size = 0x2000, scoped, tag = 'output window, operand 0, single buffered']
    %9 = vsyncpa [#allocation4], 0
    %10 = vsyncpa [#allocation7], 0
    %11 = vsyncpa [#allocation10], 0
    %12 = vsyncpa [#allocation5], 0
    // Predicated region
    $region2: #{tpu_custom_call.1} parent=1 // pred_check
      _
    $region3: #{tpu_custom_call.1} parent=1 // pred_check_branch
      %14 = sbr.rel (0) target = $region5
    $region4: #{tpu_custom_call.1} parent=1 // pred_region
      %s16 = ssub.s32 128, 128
      %17 = vsyncadd [#allocation4], %s16
      %s18 = sshll.u32 [#allocation3], 4
      %s19 = int_to_ptr.vmem [resolvable:$true] %s18
      %24 = dma.hbm_to_vmem [thread:$0]  %s0, 128, %s19, [#allocation4], 64, 64, 4
    $region5: #{tpu_custom_call.1} parent=1 // pred_fallthru
      _
    // Predicated region
    $region6: #{tpu_custom_call.1} parent=1 // pred_check
      _
    $region7: #{tpu_custom_call.1} parent=1 // pred_check_branch
      %26 = sbr.rel (0) target = $region9
    $region8: #{tpu_custom_call.1} parent=1 // pred_region
      %s28 = ssub.s32 2048, 2048
      %29 = vsyncadd [#allocation7], %s28
      %s30 = sshll.u32 [#allocation6], 4
      %s31 = int_to_ptr.vmem [resolvable:$true] %s30
      %36 = dma.hbm_to_vmem [thread:$0]  %s1, 2048, %s31, [#allocation7], 128, 128, 8
    $region9: #{tpu_custom_call.1} parent=1 // pred_fallthru
      _
    // Predicated region
    $region10: #{tpu_custom_call.1} parent=1 // pred_check
      _
    $region11: #{tpu_custom_call.1} parent=1 // pred_check_branch
      %38 = sbr.rel (0) target = $region13
    $region12: #{tpu_custom_call.1} parent=1 // pred_region
      %s40 = ssub.s32 2048, 2048
      %41 = vsyncadd [#allocation7], %s40
      %s42 = sshll.u32 [#allocation8], 4
      %s43 = int_to_ptr.vmem [resolvable:$true] %s42
      %48 = dma.hbm_to_vmem [thread:$0]  %s2, 2048, %s43, [#allocation7], 128, 128, 8
    $region13: #{tpu_custom_call.1} parent=1 // pred_fallthru
      _
    // Predicated region
    $region14: #{tpu_custom_call.1} parent=1 // pred_check
      _
    $region15: #{tpu_custom_call.1} parent=1 // pred_check_branch
      %50 = sbr.rel (0) target = $region17
    $region16: #{tpu_custom_call.1} parent=1 // pred_region
      %s52 = ssub.s32 2048, 2048
      %53 = vsyncadd [#allocation10], %s52
      %s54 = sshll.u32 [#allocation9], 4
      %s55 = int_to_ptr.vmem [resolvable:$true] %s54
      %60 = dma.hbm_to_vmem [thread:$0]  %s3, 2048, %s55, [#allocation10], 64, 64, 4
    $region17: #{tpu_custom_call.1} parent=1 // pred_fallthru
      _
    // Predicated region
    $region18: #{tpu_custom_call.1} parent=1 // pred_check
      _
    $region19: #{tpu_custom_call.1} parent=1 // pred_check_branch
      %62 = sbr.rel (0) target = $region21
    $region20: #{tpu_custom_call.1} parent=1 // pred_region
      %63 = dma.done [#allocation4], 128
    $region21: #{tpu_custom_call.1} parent=1 // pred_fallthru
      _
    // Predicated region
    $region22: #{tpu_custom_call.1} parent=1 // pred_check
      _
    $region23: #{tpu_custom_call.1} parent=1 // pred_check_branch
      %65 = sbr.rel (0) target = $region25
    $region24: #{tpu_custom_call.1} parent=1 // pred_region
      %66 = dma.done [#allocation7], 2048
    $region25: #{tpu_custom_call.1} parent=1 // pred_fallthru
      _
    // Predicated region
    $region26: #{tpu_custom_call.1} parent=1 // pred_check
      _
    $region27: #{tpu_custom_call.1} parent=1 // pred_check_branch
      %68 = sbr.rel (0) target = $region29
    $region28: #{tpu_custom_call.1} parent=1 // pred_region
      %69 = dma.done [#allocation7], 2048
    $region29: #{tpu_custom_call.1} parent=1 // pred_fallthru
      _
    // Predicated region
    $region30: #{tpu_custom_call.1} parent=1 // pred_check
      _
    $region31: #{tpu_custom_call.1} parent=1 // pred_check_branch
      %71 = sbr.rel (0) target = $region33
    $region32: #{tpu_custom_call.1} parent=1 // pred_region
      %72 = dma.done [#allocation10], 2048
    $region33: #{tpu_custom_call.1} parent=1 // pred_fallthru
      _
    %v74 = vld [vmem:[#allocation3] sm:$0xf]
    %v75 = vld [vmem:[#allocation3 + $0x4] sm:$0xf]
    %v76 = vld [vmem:[#allocation6] sm:$0xff]
    %v77 = vld [vmem:[#allocation6 + $0x8] sm:$0xff]
    %v78 = vld [vmem:[#allocation6 + $0x10] sm:$0xff]
    %v79 = vld [vmem:[#allocation6 + $0x18] sm:$0xff]
    %v80 = vld [vmem:[#allocation6 + $0x20] sm:$0xff]
    %v81 = vld [vmem:[#allocation6 + $0x28] sm:$0xff]
    %v82 = vld [vmem:[#allocation6 + $0x30] sm:$0xff]
    %v83 = vld [vmem:[#allocation6 + $0x38] sm:$0xff]
    %v84 = vld [vmem:[#allocation6 + $0x40] sm:$0xff]
    %v85 = vld [vmem:[#allocation6 + $0x48] sm:$0xff]
    %v86 = vld [vmem:[#allocation6 + $0x50] sm:$0xff]
    %v87 = vld [vmem:[#allocation6 + $0x58] sm:$0xff]
    %v88 = vld [vmem:[#allocation6 + $0x60] sm:$0xff]
    %v89 = vld [vmem:[#allocation6 + $0x68] sm:$0xff]
    %v90 = vld [vmem:[#allocation6 + $0x70] sm:$0xff]
    %v91 = vld [vmem:[#allocation6 + $0x78] sm:$0xff]
    %v94 = vunpack.c.l.b16 %v74
    %v95 = vunpack.c.l.b16 %v75
    %v96 = vpack.c.b16 %v95, %v94
    %v114 = vunpack.c.l.b16 %v76
    %v115 = vunpack.c.h.b16 %v76
    %v116 = vunpack.c.l.b16 %v77
    %v117 = vunpack.c.h.b16 %v77
    %v118 = vunpack.c.l.b16 %v78
    %v119 = vunpack.c.h.b16 %v78
    %v120 = vunpack.c.l.b16 %v79
    %v121 = vunpack.c.h.b16 %v79
    %v122 = vunpack.c.l.b16 %v80
    %v123 = vunpack.c.h.b16 %v80
    %v124 = vunpack.c.l.b16 %v81
    %v125 = vunpack.c.h.b16 %v81
    %v126 = vunpack.c.l.b16 %v82
    %v127 = vunpack.c.h.b16 %v82
    %v128 = vunpack.c.l.b16 %v83
    %v129 = vunpack.c.h.b16 %v83
    %v130 = vunpack.c.l.b16 %v84
    %v131 = vunpack.c.h.b16 %v84
    %v132 = vunpack.c.l.b16 %v85
    %v133 = vunpack.c.h.b16 %v85
    %v134 = vunpack.c.l.b16 %v86
    %v135 = vunpack.c.h.b16 %v86
    %v136 = vunpack.c.l.b16 %v87
    %v137 = vunpack.c.h.b16 %v87
    %v138 = vunpack.c.l.b16 %v88
    %v139 = vunpack.c.h.b16 %v88
    %v140 = vunpack.c.l.b16 %v89
    %v141 = vunpack.c.h.b16 %v89
    %v142 = vunpack.c.l.b16 %v90
    %v143 = vunpack.c.h.b16 %v90
    %v144 = vunpack.c.l.b16 %v91
    %v145 = vunpack.c.h.b16 %v91
    %v146 = vpack.c.b16 %v116, %v114
    %v147 = vpack.c.b16 %v117, %v115
    %v148 = vpack.c.b16 %v120, %v118
    %v149 = vpack.c.b16 %v121, %v119
    %v150 = vpack.c.b16 %v124, %v122
    %v151 = vpack.c.b16 %v125, %v123
    %v152 = vpack.c.b16 %v128, %v126
    %v153 = vpack.c.b16 %v129, %v127
    %v154 = vpack.c.b16 %v132, %v130
    %v155 = vpack.c.b16 %v133, %v131
    %v156 = vpack.c.b16 %v136, %v134
    %v157 = vpack.c.b16 %v137, %v135
    %v158 = vpack.c.b16 %v140, %v138
    %v159 = vpack.c.b16 %v141, %v139
    %v160 = vpack.c.b16 %v144, %v142
    %v161 = vpack.c.b16 %v145, %v143
    %178 = vmatprep.subr.bf16.mxu0 %v147
    %179 = vmatpush1.bf16.msra.mxu0 %v146
    %180 = vmatprep.subr.bf16.mxu0 %v149
    %181 = vmatpush1.bf16.msra.mxu0 %v148
    %182 = vmatprep.subr.bf16.mxu0 %v151
    %183 = vmatpush1.bf16.msra.mxu0 %v150
    %184 = vmatprep.subr.bf16.mxu0 %v153
    %185 = vmatpush1.bf16.msra.mxu0 %v152
    %186 = vmatprep.subr.bf16.mxu0 %v155
    %187 = vmatpush1.bf16.msra.mxu0 %v154
    %188 = vmatprep.subr.bf16.mxu0 %v157
    %189 = vmatpush1.bf16.msra.mxu0 %v156
    %190 = vmatprep.subr.bf16.mxu0 %v159
    %191 = vmatpush1.bf16.msra.mxu0 %v158
    %192 = vmatprep.subr.bf16.mxu0 %v161
    %193 = vmatpush1.bf16.msra.mxu0 %v160
    %194 = vmatprep.subr.bf16.mxu0 0
    %195 = vmatpush1.bf16.msra.mxu0 0
    %196 = vmatprep.subr.bf16.mxu0 0
    %197 = vmatpush1.bf16.msra.mxu0 0
    %198 = vmatprep.subr.bf16.mxu0 0
    %199 = vmatpush1.bf16.msra.mxu0 0
    %200 = vmatprep.subr.bf16.mxu0 0
    %201 = vmatpush1.bf16.msra.mxu0 0
    %202 = vmatprep.subr.bf16.mxu0 0
    %203 = vmatpush1.bf16.msra.mxu0 0
    %204 = vmatprep.subr.bf16.mxu0 0
    %205 = vmatpush1.bf16.msra.mxu0 0
    %206 = vmatprep.subr.bf16.mxu0 0
    %207 = vmatpush1.bf16.msra.mxu0 0
    %208 = vmatprep.subr.bf16.mxu0 0
    %209 = vmatpush1.bf16.msra.mxu0 0
    %210 = vmatprep.mubr.bf16.mxu0 0
    %211 = vmatmul.mubr.bf16.gmra.mrb[0].mxu0 %v96
    %v212 = vpop.f32.mrb[0].mxu0
    %v213 = vadd.f32 0.0, %v212
    %v214 = vpop.f32.mrb[0].mxu0
    %v215 = vadd.f32 0.0, %v214
    %v216 = vpop.f32.mrb[0].mxu0
    %v217 = vadd.f32 0.0, %v216
    %v218 = vpop.f32.mrb[0].mxu0
    %v219 = vadd.f32 0.0, %v218
    %220 = vdwg.mxu0
    %v221 = vld [vmem:[#allocation8] sm:$0xff]
    %v222 = vld [vmem:[#allocation8 + $0x8] sm:$0xff]
    %v223 = vld [vmem:[#allocation8 + $0x10] sm:$0xff]
    %v224 = vld [vmem:[#allocation8 + $0x18] sm:$0xff]
    %v225 = vld [vmem:[#allocation8 + $0x20] sm:$0xff]
    %v226 = vld [vmem:[#allocation8 + $0x28] sm:$0xff]
    %v227 = vld [vmem:[#allocation8 + $0x30] sm:$0xff]
    %v228 = vld [vmem:[#allocation8 + $0x38] sm:$0xff]
    %v229 = vld [vmem:[#allocation8 + $0x40] sm:$0xff]
    %v230 = vld [vmem:[#allocation8 + $0x48] sm:$0xff]
    %v231 = vld [vmem:[#allocation8 + $0x50] sm:$0xff]
    %v232 = vld [vmem:[#allocation8 + $0x58] sm:$0xff]
    %v233 = vld [vmem:[#allocation8 + $0x60] sm:$0xff]
    %v234 = vld [vmem:[#allocation8 + $0x68] sm:$0xff]
    %v235 = vld [vmem:[#allocation8 + $0x70] sm:$0xff]
    %v236 = vld [vmem:[#allocation8 + $0x78] sm:$0xff]
    %v253 = vunpack.c.l.b16 %v221
    %v254 = vunpack.c.h.b16 %v221
    %v255 = vunpack.c.l.b16 %v222
    %v256 = vunpack.c.h.b16 %v222
    %v257 = vunpack.c.l.b16 %v223
    %v258 = vunpack.c.h.b16 %v223
    %v259 = vunpack.c.l.b16 %v224
    %v260 = vunpack.c.h.b16 %v224
    %v261 = vunpack.c.l.b16 %v225
    %v262 = vunpack.c.h.b16 %v225
    %v263 = vunpack.c.l.b16 %v226
    %v264 = vunpack.c.h.b16 %v226
    %v265 = vunpack.c.l.b16 %v227
    %v266 = vunpack.c.h.b16 %v227
    %v267 = vunpack.c.l.b16 %v228
    %v268 = vunpack.c.h.b16 %v228
    %v269 = vunpack.c.l.b16 %v229
    %v270 = vunpack.c.h.b16 %v229
    %v271 = vunpack.c.l.b16 %v230
    %v272 = vunpack.c.h.b16 %v230
    %v273 = vunpack.c.l.b16 %v231
    %v274 = vunpack.c.h.b16 %v231
    %v275 = vunpack.c.l.b16 %v232
    %v276 = vunpack.c.h.b16 %v232
    %v277 = vunpack.c.l.b16 %v233
    %v278 = vunpack.c.h.b16 %v233
    %v279 = vunpack.c.l.b16 %v234
    %v280 = vunpack.c.h.b16 %v234
    %v281 = vunpack.c.l.b16 %v235
    %v282 = vunpack.c.h.b16 %v235
    %v283 = vunpack.c.l.b16 %v236
    %v284 = vunpack.c.h.b16 %v236
    %v285 = vpack.c.b16 %v255, %v253
    %v286 = vpack.c.b16 %v256, %v254
    %v287 = vpack.c.b16 %v259, %v257
    %v288 = vpack.c.b16 %v260, %v258
    %v289 = vpack.c.b16 %v263, %v261
    %v290 = vpack.c.b16 %v264, %v262
    %v291 = vpack.c.b16 %v267, %v265
    %v292 = vpack.c.b16 %v268, %v266
    %v293 = vpack.c.b16 %v271, %v269
    %v294 = vpack.c.b16 %v272, %v270
    %v295 = vpack.c.b16 %v275, %v273
    %v296 = vpack.c.b16 %v276, %v274
    %v297 = vpack.c.b16 %v279, %v277
    %v298 = vpack.c.b16 %v280, %v278
    %v299 = vpack.c.b16 %v283, %v281
    %v300 = vpack.c.b16 %v284, %v282
    %317 = vmatprep.subr.bf16.mxu0 %v286
    %318 = vmatpush1.bf16.msra.mxu0 %v285
    %319 = vmatprep.subr.bf16.mxu0 %v288
    %320 = vmatpush1.bf16.msra.mxu0 %v287
    %321 = vmatprep.subr.bf16.mxu0 %v290
    %322 = vmatpush1.bf16.msra.mxu0 %v289
    %323 = vmatprep.subr.bf16.mxu0 %v292
    %324 = vmatpush1.bf16.msra.mxu0 %v291
    %325 = vmatprep.subr.bf16.mxu0 %v294
    %326 = vmatpush1.bf16.msra.mxu0 %v293
    %327 = vmatprep.subr.bf16.mxu0 %v296
    %328 = vmatpush1.bf16.msra.mxu0 %v295
    %329 = vmatprep.subr.bf16.mxu0 %v298
    %330 = vmatpush1.bf16.msra.mxu0 %v297
    %331 = vmatprep.subr.bf16.mxu0 %v300
    %332 = vmatpush1.bf16.msra.mxu0 %v299
    %333 = vmatprep.subr.bf16.mxu0 0
    %334 = vmatpush1.bf16.msra.mxu0 0
    %335 = vmatprep.subr.bf16.mxu0 0
    %336 = vmatpush1.bf16.msra.mxu0 0
    %337 = vmatprep.subr.bf16.mxu0 0
    %338 = vmatpush1.bf16.msra.mxu0 0
    %339 = vmatprep.subr.bf16.mxu0 0
    %340 = vmatpush1.bf16.msra.mxu0 0
    %341 = vmatprep.subr.bf16.mxu0 0
    %342 = vmatpush1.bf16.msra.mxu0 0
    %343 = vmatprep.subr.bf16.mxu0 0
    %344 = vmatpush1.bf16.msra.mxu0 0
    %345 = vmatprep.subr.bf16.mxu0 0
    %346 = vmatpush1.bf16.msra.mxu0 0
    %347 = vmatprep.subr.bf16.mxu0 0
    %348 = vmatpush1.bf16.msra.mxu0 0
    %349 = vmatprep.mubr.bf16.mxu0 0
    %350 = vmatmul.mubr.bf16.gmra.mrb[0].mxu0 %v96
    %v351 = vpop.f32.mrb[0].mxu0
    %v352 = vadd.f32 0.0, %v351
    %v353 = vpop.f32.mrb[0].mxu0
    %v354 = vadd.f32 0.0, %v353
    %v355 = vpop.f32.mrb[0].mxu0
    %v356 = vadd.f32 0.0, %v355
    %v357 = vpop.f32.mrb[0].mxu0
    %v358 = vadd.f32 0.0, %v357
    %359 = vdwg.mxu0
    %v360 = vxor.u32 %v213, 2147483648
    %v361 = vxor.u32 %v215, 2147483648
    %v362 = vxor.u32 %v217, 2147483648
    %v363 = vxor.u32 %v219, 2147483648
    %v364 = vmul.f32 %v360, 1.442695
    %v365 = vpow.pop %v364
    %v366 = vmul.f32 %v361, 1.442695
    %v367 = vpow.pop %v366
    %v368 = vmul.f32 %v362, 1.442695
    %v369 = vpow.pop %v368
    %v370 = vmul.f32 %v363, 1.442695
    %v371 = vpow.pop %v370
    %v372 = vadd.f32 %v365, 1.0
    %v373 = vadd.f32 %v367, 1.0
    %v374 = vadd.f32 %v369, 1.0
    %v375 = vadd.f32 %v371, 1.0
    %v376 = vrcp.pop %v372
    %v377 = vmul.f32 1.0, %v376
    %v378 = vrcp.pop %v373
    %v379 = vmul.f32 1.0, %v378
    %v380 = vrcp.pop %v374
    %v381 = vmul.f32 1.0, %v380
    %v382 = vrcp.pop %v375
    %v383 = vmul.f32 1.0, %v382
    %v384 = vmul.f32 %v213, %v377
    %v385 = vmul.f32 %v215, %v379
    %v386 = vmul.f32 %v217, %v381
    %v387 = vmul.f32 %v219, %v383
    %v388 = vmul.f32 %v384, %v352
    %v389 = vmul.f32 %v385, %v354
    %v390 = vmul.f32 %v386, %v356
    %v391 = vmul.f32 %v387, %v358
    %v392 = vpack.c.bf16 %v390, %v388
    %v393 = vpack.c.bf16 %v391, %v389
    %v394 = vld [vmem:[#allocation9] sm:$0xf]
    %v395 = vld [vmem:[#allocation9 + $0x4] sm:$0xf]
    %v396 = vld [vmem:[#allocation9 + $0x8] sm:$0xf]
    %v397 = vld [vmem:[#allocation9 + $0xc] sm:$0xf]
    %v398 = vld [vmem:[#allocation9 + $0x10] sm:$0xf]
    %v399 = vld [vmem:[#allocation9 + $0x14] sm:$0xf]
    %v400 = vld [vmem:[#allocation9 + $0x18] sm:$0xf]
    %v401 = vld [vmem:[#allocation9 + $0x1c] sm:$0xf]
    %v402 = vld [vmem:[#allocation9 + $0x20] sm:$0xf]
    %v403 = vld [vmem:[#allocation9 + $0x24] sm:$0xf]
    %v404 = vld [vmem:[#allocation9 + $0x28] sm:$0xf]
    %v405 = vld [vmem:[#allocation9 + $0x2c] sm:$0xf]
    %v406 = vld [vmem:[#allocation9 + $0x30] sm:$0xf]
    %v407 = vld [vmem:[#allocation9 + $0x34] sm:$0xf]
    %v408 = vld [vmem:[#allocation9 + $0x38] sm:$0xf]
    %v409 = vld [vmem:[#allocation9 + $0x3c] sm:$0xf]
    %v410 = vld [vmem:[#allocation9 + $0x40] sm:$0xf]
    %v411 = vld [vmem:[#allocation9 + $0x44] sm:$0xf]
    %v412 = vld [vmem:[#allocation9 + $0x48] sm:$0xf]
    %v413 = vld [vmem:[#allocation9 + $0x4c] sm:$0xf]
    %v414 = vld [vmem:[#allocation9 + $0x50] sm:$0xf]
    %v415 = vld [vmem:[#allocation9 + $0x54] sm:$0xf]
    %v416 = vld [vmem:[#allocation9 + $0x58] sm:$0xf]
    %v417 = vld [vmem:[#allocation9 + $0x5c] sm:$0xf]
    %v418 = vld [vmem:[#allocation9 + $0x60] sm:$0xf]
    %v419 = vld [vmem:[#allocation9 + $0x64] sm:$0xf]
    %v420 = vld [vmem:[#allocation9 + $0x68] sm:$0xf]
    %v421 = vld [vmem:[#allocation9 + $0x6c] sm:$0xf]
    %v422 = vld [vmem:[#allocation9 + $0x70] sm:$0xf]
    %v423 = vld [vmem:[#allocation9 + $0x74] sm:$0xf]
    %v424 = vld [vmem:[#allocation9 + $0x78] sm:$0xf]
    %v425 = vld [vmem:[#allocation9 + $0x7c] sm:$0xf]
    %v458 = vunpack.c.l.b16 %v394
    %v459 = vunpack.c.l.b16 %v395
    %v460 = vunpack.c.l.b16 %v396
    %v461 = vunpack.c.l.b16 %v397
    %v462 = vunpack.c.l.b16 %v398
    %v463 = vunpack.c.l.b16 %v399
    %v464 = vunpack.c.l.b16 %v400
    %v465 = vunpack.c.l.b16 %v401
    %v466 = vunpack.c.l.b16 %v402
    %v467 = vunpack.c.l.b16 %v403
    %v468 = vunpack.c.l.b16 %v404
    %v469 = vunpack.c.l.b16 %v405
    %v470 = vunpack.c.l.b16 %v406
    %v471 = vunpack.c.l.b16 %v407
    %v472 = vunpack.c.l.b16 %v408
    %v473 = vunpack.c.l.b16 %v409
    %v474 = vunpack.c.l.b16 %v410
    %v475 = vunpack.c.l.b16 %v411
    %v476 = vunpack.c.l.b16 %v412
    %v477 = vunpack.c.l.b16 %v413
    %v478 = vunpack.c.l.b16 %v414
    %v479 = vunpack.c.l.b16 %v415
    %v480 = vunpack.c.l.b16 %v416
    %v481 = vunpack.c.l.b16 %v417
    %v482 = vunpack.c.l.b16 %v418
    %v483 = vunpack.c.l.b16 %v419
    %v484 = vunpack.c.l.b16 %v420
    %v485 = vunpack.c.l.b16 %v421
    %v486 = vunpack.c.l.b16 %v422
    %v487 = vunpack.c.l.b16 %v423
    %v488 = vunpack.c.l.b16 %v424
    %v489 = vunpack.c.l.b16 %v425
    %v490 = vpack.c.b16 %v459, %v458
    %v491 = vpack.c.b16 %v461, %v460
    %v492 = vpack.c.b16 %v463, %v462
    %v493 = vpack.c.b16 %v465, %v464
    %v494 = vpack.c.b16 %v467, %v466
    %v495 = vpack.c.b16 %v469, %v468
    %v496 = vpack.c.b16 %v471, %v470
    %v497 = vpack.c.b16 %v473, %v472
    %v498 = vpack.c.b16 %v475, %v474
    %v499 = vpack.c.b16 %v477, %v476
    %v500 = vpack.c.b16 %v479, %v478
    %v501 = vpack.c.b16 %v481, %v480
    %v502 = vpack.c.b16 %v483, %v482
    %v503 = vpack.c.b16 %v485, %v484
    %v504 = vpack.c.b16 %v487, %v486
    %v505 = vpack.c.b16 %v489, %v488
    %522 = vmatprep.subr.bf16.mxu0 0
    %523 = vmatpush1.bf16.msra.mxu0 %v490
    %524 = vmatprep.subr.bf16.mxu0 0
    %525 = vmatpush1.bf16.msra.mxu0 %v491
    %526 = vmatprep.subr.bf16.mxu0 0
    %527 = vmatpush1.bf16.msra.mxu0 %v492
    %528 = vmatprep.subr.bf16.mxu0 0
    %529 = vmatpush1.bf16.msra.mxu0 %v493
    %530 = vmatprep.subr.bf16.mxu0 0
    %531 = vmatpush1.bf16.msra.mxu0 %v494
    %532 = vmatprep.subr.bf16.mxu0 0
    %533 = vmatpush1.bf16.msra.mxu0 %v495
    %534 = vmatprep.subr.bf16.mxu0 0
    %535 = vmatpush1.bf16.msra.mxu0 %v496
    %536 = vmatprep.subr.bf16.mxu0 0
    %537 = vmatpush1.bf16.msra.mxu0 %v497
    %538 = vmatprep.subr.bf16.mxu0 0
    %539 = vmatpush1.bf16.msra.mxu0 %v498
    %540 = vmatprep.subr.bf16.mxu0 0
    %541 = vmatpush1.bf16.msra.mxu0 %v499
    %542 = vmatprep.subr.bf16.mxu0 0
    %543 = vmatpush1.bf16.msra.mxu0 %v500
    %544 = vmatprep.subr.bf16.mxu0 0
    %545 = vmatpush1.bf16.msra.mxu0 %v501
    %546 = vmatprep.subr.bf16.mxu0 0
    %547 = vmatpush1.bf16.msra.mxu0 %v502
    %548 = vmatprep.subr.bf16.mxu0 0
    %549 = vmatpush1.bf16.msra.mxu0 %v503
    %550 = vmatprep.subr.bf16.mxu0 0
    %551 = vmatpush1.bf16.msra.mxu0 %v504
    %552 = vmatprep.subr.bf16.mxu0 0
    %553 = vmatpush1.bf16.msra.mxu0 %v505
    %554 = vmatprep.mubr.bf16.mxu0 %v393
    %555 = vmatmul.mubr.bf16.gmra.mrb[0].mxu0 %v392
    %v556 = vpop.f32.mrb[0].mxu0
    %v557 = vadd.f32 0.0, %v556
    %v558 = vpop.f32.mrb[0].mxu0
    %v559 = vpop.f32.mrb[0].mxu0
    %v560 = vadd.f32 0.0, %v559
    %v561 = vpop.f32.mrb[0].mxu0
    %562 = vdwg.mxu0
    %p563 = scmp.eq.s32.totalorder 0, 0
    // Predicated region
    $region34: #{tpu_custom_call.1} parent=1 // pred_check
      %p564 = pneg %p563
    $region35: #{tpu_custom_call.1} parent=1 // pred_check_branch
      %566 = sbr.rel (%p564) target = $region37
    $region36: #{tpu_custom_call.1} parent=1 // pred_region
      %567 = vst [vmem:[#allocation2] sm:$0xff] %v557
      %568 = vst [vmem:[#allocation2 + $0x8] sm:$0xff] %v560
    $region37: #{tpu_custom_call.1} parent=1 // pred_fallthru
      _
    %p569 = scmp.gt.s32.totalorder 0, 0
    // Predicated region
    $region38: #{tpu_custom_call.1} parent=1 // pred_check
      %p570 = pneg %p569
    $region39: #{tpu_custom_call.1} parent=1 // pred_check_branch
      %572 = sbr.rel (%p570) target = $region41
    $region40: #{tpu_custom_call.1} parent=1 // pred_region
      %v573 = vld [vmem:[#allocation2] sm:$0xff]
      %v574 = vld [vmem:[#allocation2 + $0x8] sm:$0xff]
      %v575 = vadd.f32 %v573, %v557
      %v576 = vadd.f32 %v574, %v560
      %577 = vst [vmem:[#allocation2] sm:$0xff] %v575
      %578 = vst [vmem:[#allocation2 + $0x8] sm:$0xff] %v576
    $region41: #{tpu_custom_call.1} parent=1 // pred_fallthru
      _
    // Predicated region
    $region42: #{tpu_custom_call.1} parent=1 // pred_check
      %p579 = pneg %p563
    $region43: #{tpu_custom_call.1} parent=1 // pred_check_branch
      %581 = sbr.rel (%p579) target = $region45
    $region44: #{tpu_custom_call.1} parent=1 // pred_region
      %v582 = vld [vmem:[#allocation2] sm:$0xff]
      %v583 = vld [vmem:[#allocation2 + $0x8] sm:$0xff]
      %584 = vst [vmem:[#allocation11] sm:$0xff] %v582
      %585 = vst [vmem:[#allocation11 + $0x8] sm:$0xff] %v583
    $region45: #{tpu_custom_call.1} parent=1 // pred_fallthru
      _
    // Predicated region
    $region46: #{tpu_custom_call.1} parent=1 // pred_check
      _
    $region47: #{tpu_custom_call.1} parent=1 // pred_check_branch
      %587 = sbr.rel (0) target = $region49
    $region48: #{tpu_custom_call.1} parent=1 // pred_region
      %s589 = ssub.s32 256, 256
      %590 = vsyncadd [#allocation5], %s589
      %s591 = sshll.u32 [#allocation11], 4
      %s592 = int_to_ptr.vmem [resolvable:$true] %s591
      %597 = dma.vmem_to_hbm [thread:$0]  %s592, 256, %s4, [#allocation5], 128, 128, 8
    $region49: #{tpu_custom_call.1} parent=1 // pred_fallthru
      _
    // Predicated region
    $region50: #{tpu_custom_call.1} parent=1 // pred_check
      _
    $region51: #{tpu_custom_call.1} parent=1 // pred_check_branch
      %599 = sbr.rel (0) target = $region53
    $region52: #{tpu_custom_call.1} parent=1 // pred_region
      %600 = dma.done [#allocation5], 256
    $region53: #{tpu_custom_call.1} parent=1 // pred_fallthru
      _
    %601 = vsyncpa [#allocation4], 1
    %602 = vsyncpa [#allocation7], 1
    %603 = vsyncpa [#allocation10], 1
    %604 = vsyncpa [#allocation5], 1

</llo_original>
